<compile_context>
chip_gen: v5e
topology: v5e:2x2
jax: 0.10.0
libtpu: 0.0.40
codegen_flags: <defaults>
</compile_context>

<pallas_src>
import numpy as np
import jax
import jax.numpy as jnp
from jax import lax
from jax.experimental import pallas as pl
from jax.experimental.pallas import tpu as pltpu


# ---------------------------------------------------------------------------
# Bicubic kernel construction (identical math to the PyTorch reference).
# ---------------------------------------------------------------------------
def kernel_cubic(zoom, phase, length=None):
    assert zoom > 0
    lower_bound = np.ceil(-2 * zoom - phase)
    higher_bound = np.floor(2 * zoom - phase)
    anchor = max(abs(lower_bound), abs(higher_bound))
    index = np.arange(-anchor + 1, anchor + 1)
    if length is not None:
        assert length >= 2 * anchor
        anchor = np.ceil(length / 2)
        index = np.arange(-anchor + 1, length - anchor + 1)
    pos = abs(index + phase) / zoom
    kernel = np.zeros(np.size(pos))
    idx = pos < 2
    kernel[idx] = -0.5 * pos[idx] ** 3 + 2.5 * pos[idx] ** 2 - 4 * pos[idx] + 2
    idx = pos < 1
    kernel[idx] = 1.5 * pos[idx] ** 3 - 2.5 * pos[idx] ** 2 + 1
    kernel = kernel * zoom / np.sum(kernel)
    return kernel


def build_classic_params(model_id):
    """Reproduce Classic.__init__ / ClassicUpscale.__init__ (non-PS branch)."""
    assert model_id.startswith("Bicubic")
    parse = model_id.split("_")
    s = int([p for p in parse if p.startswith("s")][0][1:])
    stride = (s, s)
    pshuffle = "PS" in parse
    assert not pshuffle  # TODO(synk): PS variant not implemented.

    shift = (-1.5, -1.5)
    fh = np.asarray([kernel_cubic(stride[1], shift[1])]) / stride[1]
    fv = np.asarray([kernel_cubic(stride[0], shift[0])]) / stride[0]
    f2d = fh * fv.T                                    # (Kf, Kf)
    kH, kW = f2d.shape[0] + 1, f2d.shape[1] + 1        # ConvTranspose kernel_size
    weight = np.zeros((kH, kW), dtype=np.float32)
    weight[:-1, :-1] = (stride[0] * stride[1] * f2d).astype(np.float32)
    padding = ((f2d.shape[0] - stride[0]) // 2 + 1,) * 2
    output_padding = ((stride[0] + 1) % 2, (stride[1] + 1) % 2)
    return weight, stride, padding, output_padding


# ---------------------------------------------------------------------------
# Polyphase / separable decomposition (stride 2, kernel 11, padding 5, out_pad 1).
# ---------------------------------------------------------------------------
def _phase_taps_1d():
    """1-D taps: y[2o+r] = sum_k taps[r,k] * x[o + k - 2]   (x zero outside)."""
    kc = kernel_cubic(2, -1.5)                  # length 10
    w1d = np.concatenate([kc, [0.0]])           # length 11, last tap is the zero row/col
    taps = np.zeros((2, 5), np.float64)
    for r in range(2):                          # output phase: even / odd
        for k in range(5):                      # input offset d = k - 2
            m = (5 + r) - 2 * (k - 2)           # kernel index hit by this (phase, offset)
            if 0 <= m < 11:
                taps[r, k] = w1d[m]
    return w1d, taps


def _band_matrices(taps, th, tw):
    """Static banded, phase-interleaved matrices: y_tile = V @ x_tile @ T."""
    thp, twp = th + 4, tw + 4
    V = np.zeros((2 * th, thp), np.float32)     # vertical pass + row interleave
    T = np.zeros((twp, 2 * tw), np.float32)     # horizontal pass + column interleave
    for o in range(th):
        for r in range(2):
            V[2 * o + r, o:o + 5] = taps[r]
    for o in range(tw):
        for r in range(2):
            T[o:o + 5, 2 * o + r] = taps[r]
    return V, T


def _pick_tile(n, cap=128):
    """Largest divisor of n that is <= cap (fall back to n for awkward sizes)."""
    best = 1
    for t in range(1, min(n, cap) + 1):
        if n % t == 0:
            best = t
    if best < 8:
        best = n
    return best


# ---------------------------------------------------------------------------
# Pallas kernel: one output tile = V @ x_halo_tile @ T  (two MXU matmuls).
# ---------------------------------------------------------------------------
def _upscale_kernel(x_ref, v_ref, t_ref, o_ref):
    # x_ref: (1, 1, 1, THp, TWp)   halo'd input tile
    # v_ref: (2*TH, THp)           vertical band (taps baked in)
    # t_ref: (TWp, 2*TW)           horizontal band (taps baked in)
    # o_ref: (1, 2*TH, 2*TW)       final interleaved output tile
    x = x_ref[0, 0, 0]
    vert = jnp.dot(v_ref[...], x,
                   preferred_element_type=jnp.float32,
                   precision=lax.Precision.HIGHEST)          # (2*TH, TWp)
    o_ref[0] = jnp.dot(vert, t_ref[...],
                       preferred_element_type=jnp.float32,
                       precision=lax.Precision.HIGHEST)      # (2*TH, 2*TW)


def classic_forward(x_nchw, *, tile_h_cap=128, tile_w_cap=128):
    """Bicubic_s2 forward: ConvTranspose2d(1->1, k=11, s=2, p=5, op=1), 2x upscale."""
    B, C, H, W = x_nchw.shape
    assert C == 1
    x = x_nchw[:, 0].astype(jnp.float32)                     # (B, H, W)

    TH = _pick_tile(H, tile_h_cap)
    TW = _pick_tile(W, tile_w_cap)
    Tr, Tc = H // TH, W // TW
    THp, TWp = TH + 4, TW + 4

    _, taps = _phase_taps_1d()
    V_np, T_np = _band_matrices(taps, TH, TW)
    V = jnp.asarray(V_np)
    T = jnp.asarray(T_np)

    # 2-pixel zero halo (replaces the transposed-conv zero-dilate + pad;
    # the 4x structural zeros of the x2 upsample are never stored anywhere).
    x_pad = jnp.pad(x, ((0, 0), (2, 2), (2, 2)))             # (B, H+4, W+4)

    # Pre-slice overlapping halo tiles so the Pallas pipeline uses plain
    # non-overlapping BlockSpecs (auto double-buffered DMA).
    rows = []
    for r in range(Tr):
        cols = [x_pad[:, r * TH:r * TH + THp, c * TW:c * TW + TWp] for c in range(Tc)]
        rows.append(jnp.stack(cols, axis=1))                 # (B, Tc, THp, TWp)
    x_tiles = jnp.stack(rows, axis=1)                        # (B, Tr, Tc, THp, TWp)

    out = pl.pallas_call(
        _upscale_kernel,
        out_shape=jax.ShapeDtypeStruct((B, 2 * H, 2 * W), jnp.float32),
        grid=(B, Tr, Tc),
        in_specs=[
            pl.BlockSpec((1, 1, 1, THp, TWp), lambda b, r, c: (b, r, c, 0, 0)),
            pl.BlockSpec((2 * TH, THp), lambda b, r, c: (0, 0)),   # resident constant
            pl.BlockSpec((TWp, 2 * TW), lambda b, r, c: (0, 0)),   # resident constant
        ],
        out_specs=pl.BlockSpec((1, 2 * TH, 2 * TW), lambda b, r, c: (b, r, c)),
        compiler_params=pltpu.CompilerParams(
            dimension_semantics=("parallel", "parallel", "parallel")),
    )(x_tiles, V, T)

    return out[:, None, :, :]                                # back to NCHW


# ---------------------------------------------------------------------------
# Plain-numpy reference (direct scatter form of ConvTranspose2d) for checking.
# ---------------------------------------------------------------------------
def ref_conv_transpose(x_nchw, w, stride, padding, output_padding):
    B, C, H, W = x_nchw.shape
    s0, s1 = stride
    K0, K1 = w.shape
    p0, p1 = padding
    op0, op1 = output_padding
    Ho = (H - 1) * s0 - 2 * p0 + K0 + op0
    Wo = (W - 1) * s1 - 2 * p1 + K1 + op1
    y = np.zeros((B, 1, Ho, Wo), np.float32)
    x = np.asarray(x_nchw)
    for i1 in range(H):
        for i2 in range(W):
            for m1 in range(K0):
                j1 = i1 * s0 + m1 - p0
                if not (0 <= j1 < Ho):
                    continue
                for m2 in range(K1):
                    j2 = i2 * s1 + m2 - p1
                    if 0 <= j2 < Wo:
                        y[:, 0, j1, j2] += x[:, 0, i1, i2] * w[m1, m2]
    return y


if __name__ == "__main__":
    model_id = "Bicubic_s2"
    weight, stride, padding, output_padding = build_classic_params(model_id)
    assert stride == (2, 2) and weight.shape == (11, 11)
    assert padding == (5, 5) and output_padding == (1, 1)

    # Sanity: the ConvTranspose weight is exactly separable into the 1-D taps
    # baked into the banded matrices used by the kernel.
    w1d, _ = _phase_taps_1d()
    assert np.allclose(weight, np.outer(w1d, w1d), atol=1e-6)

    key = jax.random.PRNGKey(0)
    x = jax.random.normal(key, (2, 1, 16, 16), dtype=jnp.float32)   # NCHW

    y = jax.block_until_ready(classic_forward(x))
    assert y.shape == (2, 1, 32, 32)

    y_ref = ref_conv_transpose(np.asarray(x), weight, stride, padding, output_padding)
    np.testing.assert_allclose(np.asarray(y), y_ref, rtol=1e-4, atol=1e-4)

    print("KERNEL_OK")
</pallas_src>

<mosaic_0001>
module attributes {stable_mosaic.version = 11 : i64} {
  func.func @_upscale_kernel(%arg0: i32, %arg1: i32, %arg2: i32, %arg3: memref<1x1x1x20x20xf32, #tpu.memory_space<vmem>>, %arg4: memref<32x20xf32, #tpu.memory_space<vmem>>, %arg5: memref<20x32xf32, #tpu.memory_space<vmem>>, %arg6: memref<1x32x32xf32, #tpu.memory_space<vmem>>) attributes {dimension_semantics = [#tpu.dimension_semantics<parallel>, #tpu.dimension_semantics<parallel>, #tpu.dimension_semantics<parallel>], iteration_bounds = array<i64: 2, 1, 1>, scalar_prefetch = 0 : i64, scratch_operands = 0 : i64, tpu.core_type = #tpu.core_type<tc>, window_params = [{transform_indices = @transform_0, window_bounds = array<i64: 1, 1, 1, 20, 20>}, {pipeline_mode = #tpu.pipeline_mode<synchronous>, transform_indices = @transform_1, window_bounds = array<i64: 32, 20>}, {pipeline_mode = #tpu.pipeline_mode<synchronous>, transform_indices = @transform_2, window_bounds = array<i64: 20, 32>}, {transform_indices = @transform_3, window_bounds = array<i64: 1, 32, 32>}]} {
    %c0 = arith.constant 0 : index
    %c0_0 = arith.constant 0 : index
    %c0_1 = arith.constant 0 : index
    %c0_2 = arith.constant 0 : index
    %c0_3 = arith.constant 0 : index
    %0 = vector.load %arg3[%c0, %c0_0, %c0_1, %c0_2, %c0_3] : memref<1x1x1x20x20xf32, #tpu.memory_space<vmem>>, vector<1x1x1x20x20xf32>
    %1 = vector.shape_cast %0 : vector<1x1x1x20x20xf32> to vector<20x20xf32>
    %c0_4 = arith.constant 0 : index
    %c0_5 = arith.constant 0 : index
    %2 = vector.load %arg4[%c0_4, %c0_5] : memref<32x20xf32, #tpu.memory_space<vmem>>, vector<32x20xf32>
    %cst = arith.constant dense<0.000000e+00> : vector<32x20xf32>
    %3 = tpu.matmul %2, %1, %cst {dimension_numbers = #tpu.dot_dimension_numbers<[1], [0], [0], [1], [0, 0, 1, 1], [], []>, precision = #tpu.contract_precision<fp32>} : vector<32x20xf32>, vector<20x20xf32>, vector<32x20xf32> -> vector<32x20xf32>
    %c0_6 = arith.constant 0 : index
    %c0_7 = arith.constant 0 : index
    %4 = vector.load %arg5[%c0_6, %c0_7] : memref<20x32xf32, #tpu.memory_space<vmem>>, vector<20x32xf32>
    %cst_8 = arith.constant dense<0.000000e+00> : vector<32x32xf32>
    %5 = tpu.matmul %3, %4, %cst_8 {dimension_numbers = #tpu.dot_dimension_numbers<[1], [0], [0], [1], [0, 0, 1, 1], [], []>, precision = #tpu.contract_precision<fp32>} : vector<32x20xf32>, vector<20x32xf32>, vector<32x32xf32> -> vector<32x32xf32>
    %c0_9 = arith.constant 0 : index
    %c0_10 = arith.constant 0 : index
    %c0_11 = arith.constant 0 : index
    %6 = vector.load %arg6[%c0_9, %c0_10, %c0_11] : memref<1x32x32xf32, #tpu.memory_space<vmem>>, vector<1x32x32xf32>
    %7 = vector.shape_cast %6 : vector<1x32x32xf32> to vector<32x32xf32>
    %8 = vector.shape_cast %5 : vector<32x32xf32> to vector<1x32x32xf32>
    tpu.vector_store %arg6[%c0_9, %c0_10, %c0_11], %8 {strides = array<i32>} : memref<1x32x32xf32, #tpu.memory_space<vmem>>, vector<1x32x32xf32>,
    return
  }
  func.func @transform_0(%arg0: i32, %arg1: i32, %arg2: i32) -> (i32, i32, i32, i32, i32) {
    %c0_i32 = arith.constant 0 : i32
    %c0_i32_0 = arith.constant 0 : i32
    %c0_i32_1 = arith.constant 0 : i32
    return %arg0, %arg1, %arg2, %c0_i32, %c0_i32_0 : i32, i32, i32, i32, i32
  }
  func.func @transform_1(%arg0: i32, %arg1: i32, %arg2: i32) -> (i32, i32) {
    %c0_i32 = arith.constant 0 : i32
    %c0_i32_0 = arith.constant 0 : i32
    %c0_i32_1 = arith.constant 0 : i32
    return %c0_i32, %c0_i32_0 : i32, i32
  }
  func.func @transform_2(%arg0: i32, %arg1: i32, %arg2: i32) -> (i32, i32) {
    %c0_i32 = arith.constant 0 : i32
    %c0_i32_0 = arith.constant 0 : i32
    %c0_i32_1 = arith.constant 0 : i32
    return %c0_i32, %c0_i32_0 : i32, i32
  }
  func.func @transform_3(%arg0: i32, %arg1: i32, %arg2: i32) -> (i32, i32, i32) {
    %c0_i32 = arith.constant 0 : i32
    return %arg0, %arg1, %arg2 : i32, i32, i32
  }
}

</mosaic_0001>

<llo_original>
// kernel: tpu_custom_call.1
$region0: #{tpu_custom_call.1}
  #allocation0 [shape = 'u32[]', space=smem, size = 0x4, offset = 0x4, fixed_abs, tag = 'smem constant byte address 0x4 - core index']
  #allocation1 [shape = 'u32[72,128]{1,0:T(1,128)}', space=vmem, size = 0x9000, scoped, tag = 'internal scratch']
  %s0 = inlined_call_operand.vmem [shape: f32[2,1,1,20,20], index: 0, kind: input, shape index: {}]
  %s1 = inlined_call_operand.vmem [shape: f32[32,20], index: 1, kind: input, shape index: {}]
  %s2 = inlined_call_operand.vmem [shape: f32[20,32], index: 2, kind: input, shape index: {}]
  %s3 = inlined_call_operand.hbm [shape: f32[2,32,32], index: 3, kind: output, shape index: {}]
  %s4 = sld [smem:[#allocation0]]
  $region45: #{tpu_custom_call.1} parent=0
    _
  %s6 = ssub.s32 1, %s4
  %s7 = scalar_select 0, %s6, %s4
  $region1: #{tpu_custom_call.1} parent=0
    #allocation2 [shape = 'u8[32768]{0}', space=vmem, size = 0x8000, scoped, tag = 'output window, operand 0']
    #allocation3 [shape = 's32[2]{0}', space=sflag, size = 0x8, scoped, tag = 'scoped memory for tpu_custom_call.1']
    %8 = vsyncpa [#allocation3], 0
    %s9 = scalar_lea.sflag [#allocation3], 1
    %10 = vsyncpa %s9, 0
    loop: start=0, step=1, limit=4
    $region2: #{tpu_custom_call.1} parent=1 // loop_pre_header
      _
    $region3: #{tpu_custom_call.1} parent=1 // loop_header
      %s12 = sphi 0, %s16
      %p13 = scmp.ge.s32.totalorder %s12, 4
      %s19 = sphi 0, %s38
      %s20 = sphi 0, %s34
      %s21 = sphi 0, %s30
      %s22 = sphi 0, %s19
      %s23 = sphi 0, %s20
      %s24 = sphi 0, %s21
      %s25 = sphi 0, %s22
      %s26 = sphi 0, %s23
      %s27 = sphi 0, %s24
      %s45 = sphi 0, %s47
      %s48 = sphi 0, %s45
      %s49 = sphi 0, %s48
      %s65 = sphi 0, %s49
      %s69 = sphi 0, %s69
      %s71 = sphi 0, %s69
      %s72 = sphi 0, %s71
      %s86 = sphi 0, %s72
      %s90 = sphi 0, %s90
      %s92 = sphi 0, %s90
      %s93 = sphi 0, %s92
      %s107 = sphi 0, %s93
      %s117 = sphi 0, %s119
      %s120 = sphi 0, %s117
      %s121 = sphi 0, %s120
      %s137 = sphi 0, %s121
    $region4: #{tpu_custom_call.1} parent=1 // loop_header_branch
      %15 = sbr.rel (%p13) target = $region8
    $region5: #{tpu_custom_call.1} parent=1 // loop_body
      %s17 = ssub.s32 %s12, 1
      %s18 = ssub.s32 %s12, 2
      %s28 = sadd.s32 1, %s21
      %p29 = scmp.ge.s32.totalorder %s28, 1
      %s30 = scalar_select %p29, 0, %s28
      %s31 = sadd.s32 1, %s20
      %s32 = scalar_select %p29, %s31, %s20
      %p33 = scmp.ge.s32.totalorder %s32, 1
      %s34 = scalar_select %p33, 0, %s32
      %s35 = sadd.s32 1, %s19
      %s36 = scalar_select %p33, %s35, %s19
      %p37 = scmp.ge.s32.totalorder %s36, 2
      %s38 = scalar_select %p37, 0, %s36
      %s39 = ssub.s32 %s19, %s38
      %s40 = ssub.s32 %s20, %s34
      %s41 = sor.u32 %s39, %s40
      %s42 = ssub.s32 %s21, %s30
      %s43 = sor.u32 %s41, %s42
      %p44 = scmp.eq.s32.totalorder %s43, 0
      %s46 = sadd.s32 %s45, 1
      %s47 = scalar_select %p44, %s45, %s46
      %p50 = pneg %p44
      %p51 = scmp.eq.s32.totalorder %s12, 1
      %p52 = por %p50, %p51
      %p53 = scmp.ne.s32.totalorder %s45, %s48
      %p54 = scmp.eq.s32.totalorder %s12, 0
      %p55 = por %p53, %p54
      %p56 = scmp.ne.s32.totalorder %s45, %s48
      %p57 = scmp.eq.s32.totalorder %s17, 1
      %p58 = por %p56, %p57
      %p59 = scmp.ne.s32.totalorder %s48, %s49
      %p60 = scmp.eq.s32.totalorder %s17, 0
      %p61 = por %p59, %p60
      %p62 = scmp.ne.s32.totalorder %s48, %s49
      %p63 = scmp.eq.s32.totalorder %s18, 1
      %p64 = por %p62, %p63
      %p66 = scmp.ne.s32.totalorder %s49, %s65
      %p67 = scmp.eq.s32.totalorder %s18, 0
      %p68 = por %p66, %p67
      %s70 = sadd.s32 %s69, 1
      %p73 = scmp.eq.s32.totalorder %s12, 1
      %p74 = scmp.ne.s32.totalorder %s69, %s71
      %p75 = scmp.eq.s32.totalorder %s12, 0
      %p76 = por %p74, %p75
      %p77 = scmp.ne.s32.totalorder %s69, %s71
      %p78 = scmp.eq.s32.totalorder %s17, 1
      %p79 = por %p77, %p78
      %p80 = scmp.ne.s32.totalorder %s71, %s72
      %p81 = scmp.eq.s32.totalorder %s17, 0
      %p82 = por %p80, %p81
      %p83 = scmp.ne.s32.totalorder %s71, %s72
      %p84 = scmp.eq.s32.totalorder %s18, 1
      %p85 = por %p83, %p84
      %p87 = scmp.ne.s32.totalorder %s72, %s86
      %p88 = scmp.eq.s32.totalorder %s18, 0
      %p89 = por %p87, %p88
      %s91 = sadd.s32 %s90, 1
      %p94 = scmp.eq.s32.totalorder %s12, 1
      %p95 = scmp.ne.s32.totalorder %s90, %s92
      %p96 = scmp.eq.s32.totalorder %s12, 0
      %p97 = por %p95, %p96
      %p98 = scmp.ne.s32.totalorder %s90, %s92
      %p99 = scmp.eq.s32.totalorder %s17, 1
      %p100 = por %p98, %p99
      %p101 = scmp.ne.s32.totalorder %s92, %s93
      %p102 = scmp.eq.s32.totalorder %s17, 0
      %p103 = por %p101, %p102
      %p104 = scmp.ne.s32.totalorder %s92, %s93
      %p105 = scmp.eq.s32.totalorder %s18, 1
      %p106 = por %p104, %p105
      %p108 = scmp.ne.s32.totalorder %s93, %s107
      %p109 = scmp.eq.s32.totalorder %s18, 0
      %p110 = por %p108, %p109
      %s111 = ssub.s32 %s19, %s38
      %s112 = ssub.s32 %s20, %s34
      %s113 = sor.u32 %s111, %s112
      %s114 = ssub.s32 %s21, %s30
      %s115 = sor.u32 %s113, %s114
      %p116 = scmp.eq.s32.totalorder %s115, 0
      %s118 = sadd.s32 %s117, 1
      %s119 = scalar_select %p116, %s117, %s118
      %p122 = pneg %p116
      %p123 = scmp.eq.s32.totalorder %s12, 1
      %p124 = por %p122, %p123
      %p125 = scmp.ne.s32.totalorder %s117, %s120
      %p126 = scmp.eq.s32.totalorder %s12, 0
      %p127 = por %p125, %p126
      %p128 = scmp.ne.s32.totalorder %s117, %s120
      %p129 = scmp.eq.s32.totalorder %s17, 1
      %p130 = por %p128, %p129
      %p131 = scmp.ne.s32.totalorder %s120, %s121
      %p132 = scmp.eq.s32.totalorder %s17, 0
      %p133 = por %p131, %p132
      %p134 = scmp.ne.s32.totalorder %s120, %s121
      %p135 = scmp.eq.s32.totalorder %s18, 1
      %p136 = por %p134, %p135
      %p138 = scmp.ne.s32.totalorder %s121, %s137
      %p139 = scmp.eq.s32.totalorder %s18, 0
      %p140 = por %p138, %p139
      %p141 = scmp.le.s32.totalorder 1, %s12
      %p142 = scmp.lt.s32.totalorder %s12, 3
      %p143 = pnand %p141, %p142
      %p144 = pneg %p143
      // Predicated region
      $region9: #{tpu_custom_call.1} parent=5 // pred_check
        _
      $region10: #{tpu_custom_call.1} parent=5 // pred_check_branch
        %146 = sbr.rel (%p143) target = $region12
      $region11: #{tpu_custom_call.1} parent=5 // pred_region
        %s147 = ssub.s32 %s12, 1
        // Predicated region
        $region13: #{tpu_custom_call.1} parent=11 // pred_check
          %p148 = pneg %p82
        $region14: #{tpu_custom_call.1} parent=11 // pred_check_branch
          %150 = sbr.rel (%p148) target = $region16
        $region15: #{tpu_custom_call.1} parent=11 // pred_region
          _
        $region16: #{tpu_custom_call.1} parent=11 // pred_fallthru
          _
        // Predicated region
        $region17: #{tpu_custom_call.1} parent=11 // pred_check
          %p151 = pneg %p103
        $region18: #{tpu_custom_call.1} parent=11 // pred_check_branch
          %153 = sbr.rel (%p151) target = $region20
        $region19: #{tpu_custom_call.1} parent=11 // pred_region
          _
        $region20: #{tpu_custom_call.1} parent=11 // pred_fallthru
          _
      $region12: #{tpu_custom_call.1} parent=5 // pred_fallthru
        _
      %p154 = scmp.lt.s32.totalorder %s12, 2
      // Predicated region
      $region21: #{tpu_custom_call.1} parent=5 // pred_check
        %p155 = pneg %p154
      $region22: #{tpu_custom_call.1} parent=5 // pred_check_branch
        %157 = sbr.rel (%p155) target = $region24
      $region23: #{tpu_custom_call.1} parent=5 // pred_region
        // Predicated region
        $region25: #{tpu_custom_call.1} parent=23 // pred_check
          %p158 = pneg %p55
        $region26: #{tpu_custom_call.1} parent=23 // pred_check_branch
          %160 = sbr.rel (%p158) target = $region28
        $region27: #{tpu_custom_call.1} parent=23 // pred_region
          %p161 = scmp.lt.s32.totalorder %s19, 1
          %s162 = scalar_select %p161, %s19, 1
          %p163 = scmp.lt.s32.totalorder %s20, 0
          %s164 = scalar_select %p163, %s20, 0
          %p165 = scmp.lt.s32.totalorder %s21, 0
          %s166 = scalar_select %p165, %s21, 0
          %s167 = smul.addr %s166, 3
          %s168 = smul.addr %s164, 3
          %s169 = sadd.s32 %s167, %s168
          %s170 = smul.addr %s162, 3
          %s171 = sadd.s32 %s169, %s170
          %s172 = smul.addr %s171, 8
          %s173 = scalar_lea.vmem %s0, %s172
        $region28: #{tpu_custom_call.1} parent=23 // pred_fallthru
          _
      $region24: #{tpu_custom_call.1} parent=5 // pred_fallthru
        _
      %p174 = scmp.le.s32.totalorder 1, %s12
      %p175 = scmp.lt.s32.totalorder %s12, 3
      %p176 = pnand %p174, %p175
      %p177 = pneg %p176
      // Predicated region
      $region29: #{tpu_custom_call.1} parent=5 // pred_check
        _
      $region30: #{tpu_custom_call.1} parent=5 // pred_check_branch
        %179 = sbr.rel (%p176) target = $region32
      $region31: #{tpu_custom_call.1} parent=5 // pred_region
        %s180 = ssub.s32 %s12, 1
        %p181 = scmp.lt.s32.totalorder %s22, 1
        %s182 = scalar_select %p181, %s22, 1
        %p183 = scmp.lt.s32.totalorder %s23, 0
        %s184 = scalar_select %p183, %s23, 0
        %p185 = scmp.lt.s32.totalorder %s24, 0
        %s186 = scalar_select %p185, %s24, 0
        %s187 = smul.addr %s186, 3
        %s188 = smul.addr %s184, 3
        %s189 = sadd.s32 %s187, %s188
        %s190 = smul.addr %s182, 3
        %s191 = sadd.s32 %s189, %s190
        %s192 = smul.addr %s191, 8
        %s193 = scalar_lea.vmem %s0, %s192
        %p194 = pneg %p61
        %p195 = pneg %p58
        %p196 = pneg %p82
        %p197 = pneg %p79
        %p198 = pneg %p103
        %p199 = pneg %p100
        %p200 = pneg %p133
        %p201 = pneg %p130
        %s202 = sand.u32 %s120, 1
        %s203 = scalar_lea.sflag [#allocation3], %s202
        %s204 = sand.u32 %s120, 1
        %s205 = smul.addr %s204, 32
        %s206 = scalar_lea.vmem [#allocation2], %s205
        %p207 = scmp.lt.s32.totalorder %s22, 1
        %s208 = scalar_select %p207, %s22, 1
        %p209 = scmp.lt.s32.totalorder %s23, 0
        %s210 = scalar_select %p209, %s23, 0
        %p211 = scmp.lt.s32.totalorder %s24, 0
        %s212 = scalar_select %p211, %s24, 0
        %s213 = smul.addr %s212, 3
        %s214 = smul.addr %s210, 3
        %s215 = sadd.s32 %s213, %s214
        %s216 = smul.addr %s208, 3
        %s217 = sadd.s32 %s215, %s216
        %s218 = smul.addr %s217, 8
        %s219 = scalar_lea.vmem %s0, %s218
        %s220 = smul.u32 4, %s23
        %v221 = vld [vmem:[%s219] sm:$0xff]
        %v222 = vld [vmem:[%s219 + $0x8] sm:$0xff]
        %v223 = vld [vmem:[%s219 + $0x10] sm:$0xf]
        %v224 = vld [vmem:[%s1] sm:$0xff]
        %v225 = vld [vmem:[%s1 + $0x8] sm:$0xff]
        %v226 = vld [vmem:[%s1 + $0x10] sm:$0xff]
        %v227 = vld [vmem:[%s1 + $0x18] sm:$0xff]
        %vm228 = vcmask 162816
        %v230 = vsel %vm228, %v224, 0
        %v233 = vsel %vm228, %v225, 0
        %v236 = vsel %vm228, %v226, 0
        %v239 = vsel %vm228, %v227, 0
        %vm241 = vcmask 1043456
        %v243 = vsel %vm241, %v223, 0
        %245 = vmatpush.msra.mxu0 0.0
        %246 = vmatpush.msra.mxu0 0.0
        %247 = vmatpush.msra.mxu0 0.0
        %248 = vmatpush.msra.mxu0 0.0
        %249 = vmatpush.msra.mxu0 0.0
        %250 = vmatpush.msra.mxu0 0.0
        %251 = vmatpush.msra.mxu0 0.0
        %252 = vmatpush.msra.mxu0 0.0
        %253 = vmatpush.msra.mxu0 0.0
        %254 = vmatpush.msra.mxu0 0.0
        %255 = vmatpush.msra.mxu0 0.0
        %256 = vmatpush.msra.mxu0 0.0
        %257 = vmatpush.msra.mxu0 0.0
        %v258 = vand.u32 %v243, 4294901760
        %259 = vmatpush.msra.mxu0 %v258
        %v260 = vand.u32 %v222, 4294901760
        %261 = vmatpush.msra.mxu0 %v260
        %v262 = vand.u32 %v221, 4294901760
        %263 = vmatpush.msra.mxu0 %v262
        %v264 = vand.u32 %v230, 4294901760
        %v265 = vsub.f32 %v230, %v264
        %v266 = vand.u32 %v265, 4294901760
        %v267 = vsub.f32 %v265, %v266
        %v268 = vand.u32 %v267, 4294901760
        %269 = vmatmul.f32.gmra.mxu0 %v268
        %v270 = vpop.f32.mrf.mxu0
        %v271 = vadd.f32 0.0, %v270
        %v272 = vand.u32 %v233, 4294901760
        %v273 = vsub.f32 %v233, %v272
        %v274 = vand.u32 %v273, 4294901760
        %v275 = vsub.f32 %v273, %v274
        %v276 = vand.u32 %v275, 4294901760
        %277 = vmatmul.f32.gmra.mxu0 %v276
        %v278 = vpop.f32.mrf.mxu0
        %v279 = vadd.f32 0.0, %v278
        %v280 = vand.u32 %v236, 4294901760
        %v281 = vsub.f32 %v236, %v280
        %v282 = vand.u32 %v281, 4294901760
        %v283 = vsub.f32 %v281, %v282
        %v284 = vand.u32 %v283, 4294901760
        %285 = vmatmul.f32.gmra.mxu0 %v284
        %v286 = vpop.f32.mrf.mxu0
        %v287 = vadd.f32 0.0, %v286
        %v288 = vand.u32 %v239, 4294901760
        %v289 = vsub.f32 %v239, %v288
        %v290 = vand.u32 %v289, 4294901760
        %v291 = vsub.f32 %v289, %v290
        %v292 = vand.u32 %v291, 4294901760
        %293 = vmatmul.f32.gmra.mxu0 %v292
        %v294 = vpop.f32.mrf.mxu0
        %v295 = vadd.f32 0.0, %v294
        %296 = vdwg.mxu0
        %297 = vmatpush.msra.mxu0 0.0
        %298 = vmatpush.msra.mxu0 0.0
        %299 = vmatpush.msra.mxu0 0.0
        %300 = vmatpush.msra.mxu0 0.0
        %301 = vmatpush.msra.mxu0 0.0
        %302 = vmatpush.msra.mxu0 0.0
        %303 = vmatpush.msra.mxu0 0.0
        %304 = vmatpush.msra.mxu0 0.0
        %305 = vmatpush.msra.mxu0 0.0
        %306 = vmatpush.msra.mxu0 0.0
        %307 = vmatpush.msra.mxu0 0.0
        %308 = vmatpush.msra.mxu0 0.0
        %309 = vmatpush.msra.mxu0 0.0
        %v310 = vand.u32 %v243, 4294901760
        %v311 = vsub.f32 %v243, %v310
        %v312 = vand.u32 %v311, 4294901760
        %v313 = vsub.f32 %v311, %v312
        %v314 = vand.u32 %v313, 4294901760
        %315 = vmatpush.msra.mxu0 %v314
        %v316 = vand.u32 %v222, 4294901760
        %v317 = vsub.f32 %v222, %v316
        %v318 = vand.u32 %v317, 4294901760
        %v319 = vsub.f32 %v317, %v318
        %v320 = vand.u32 %v319, 4294901760
        %321 = vmatpush.msra.mxu0 %v320
        %v322 = vand.u32 %v221, 4294901760
        %v323 = vsub.f32 %v221, %v322
        %v324 = vand.u32 %v323, 4294901760
        %v325 = vsub.f32 %v323, %v324
        %v326 = vand.u32 %v325, 4294901760
        %327 = vmatpush.msra.mxu0 %v326
        %v328 = vand.u32 %v230, 4294901760
        %329 = vmatmul.f32.gmra.mxu0 %v328
        %v330 = vpop.f32.mrf.mxu0
        %v331 = vadd.f32 %v271, %v330
        %v332 = vand.u32 %v233, 4294901760
        %333 = vmatmul.f32.gmra.mxu0 %v332
        %v334 = vpop.f32.mrf.mxu0
        %v335 = vadd.f32 %v279, %v334
        %v336 = vand.u32 %v236, 4294901760
        %337 = vmatmul.f32.gmra.mxu0 %v336
        %v338 = vpop.f32.mrf.mxu0
        %v339 = vadd.f32 %v287, %v338
        %v340 = vand.u32 %v239, 4294901760
        %341 = vmatmul.f32.gmra.mxu0 %v340
        %v342 = vpop.f32.mrf.mxu0
        %v343 = vadd.f32 %v295, %v342
        %344 = vdwg.mxu0
        %345 = vmatpush.msra.mxu0 0.0
        %346 = vmatpush.msra.mxu0 0.0
        %347 = vmatpush.msra.mxu0 0.0
        %348 = vmatpush.msra.mxu0 0.0
        %349 = vmatpush.msra.mxu0 0.0
        %350 = vmatpush.msra.mxu0 0.0
        %351 = vmatpush.msra.mxu0 0.0
        %352 = vmatpush.msra.mxu0 0.0
        %353 = vmatpush.msra.mxu0 0.0
        %354 = vmatpush.msra.mxu0 0.0
        %355 = vmatpush.msra.mxu0 0.0
        %356 = vmatpush.msra.mxu0 0.0
        %357 = vmatpush.msra.mxu0 0.0
        %v358 = vand.u32 %v243, 4294901760
        %v359 = vsub.f32 %v243, %v358
        %360 = vmatpush.msra.mxu0 %v359
        %v361 = vand.u32 %v222, 4294901760
        %v362 = vsub.f32 %v222, %v361
        %363 = vmatpush.msra.mxu0 %v362
        %v364 = vand.u32 %v221, 4294901760
        %v365 = vsub.f32 %v221, %v364
        %366 = vmatpush.msra.mxu0 %v365
        %v367 = vand.u32 %v230, 4294901760
        %v368 = vsub.f32 %v230, %v367
        %369 = vmatmul.f32.gmra.mxu0 %v368
        %v370 = vpop.f32.mrf.mxu0
        %v371 = vadd.f32 %v331, %v370
        %v372 = vand.u32 %v233, 4294901760
        %v373 = vsub.f32 %v233, %v372
        %374 = vmatmul.f32.gmra.mxu0 %v373
        %v375 = vpop.f32.mrf.mxu0
        %v376 = vadd.f32 %v335, %v375
        %v377 = vand.u32 %v236, 4294901760
        %v378 = vsub.f32 %v236, %v377
        %379 = vmatmul.f32.gmra.mxu0 %v378
        %v380 = vpop.f32.mrf.mxu0
        %v381 = vadd.f32 %v339, %v380
        %v382 = vand.u32 %v239, 4294901760
        %v383 = vsub.f32 %v239, %v382
        %384 = vmatmul.f32.gmra.mxu0 %v383
        %v385 = vpop.f32.mrf.mxu0
        %v386 = vadd.f32 %v343, %v385
        %387 = vdwg.mxu0
        %388 = vmatpush.msra.mxu0 0.0
        %389 = vmatpush.msra.mxu0 0.0
        %390 = vmatpush.msra.mxu0 0.0
        %391 = vmatpush.msra.mxu0 0.0
        %392 = vmatpush.msra.mxu0 0.0
        %393 = vmatpush.msra.mxu0 0.0
        %394 = vmatpush.msra.mxu0 0.0
        %395 = vmatpush.msra.mxu0 0.0
        %396 = vmatpush.msra.mxu0 0.0
        %397 = vmatpush.msra.mxu0 0.0
        %398 = vmatpush.msra.mxu0 0.0
        %399 = vmatpush.msra.mxu0 0.0
        %400 = vmatpush.msra.mxu0 0.0
        %v401 = vand.u32 %v243, 4294901760
        %402 = vmatpush.msra.mxu0 %v401
        %v403 = vand.u32 %v222, 4294901760
        %404 = vmatpush.msra.mxu0 %v403
        %v405 = vand.u32 %v221, 4294901760
        %406 = vmatpush.msra.mxu0 %v405
        %v407 = vand.u32 %v230, 4294901760
        %v408 = vsub.f32 %v230, %v407
        %v409 = vand.u32 %v408, 4294901760
        %410 = vmatmul.f32.gmra.mxu0 %v409
        %v411 = vpop.f32.mrf.mxu0
        %v412 = vadd.f32 %v371, %v411
        %v413 = vand.u32 %v233, 4294901760
        %v414 = vsub.f32 %v233, %v413
        %v415 = vand.u32 %v414, 4294901760
        %416 = vmatmul.f32.gmra.mxu0 %v415
        %v417 = vpop.f32.mrf.mxu0
        %v418 = vadd.f32 %v376, %v417
        %v419 = vand.u32 %v236, 4294901760
        %v420 = vsub.f32 %v236, %v419
        %v421 = vand.u32 %v420, 4294901760
        %422 = vmatmul.f32.gmra.mxu0 %v421
        %v423 = vpop.f32.mrf.mxu0
        %v424 = vadd.f32 %v381, %v423
        %v425 = vand.u32 %v239, 4294901760
        %v426 = vsub.f32 %v239, %v425
        %v427 = vand.u32 %v426, 4294901760
        %428 = vmatmul.f32.gmra.mxu0 %v427
        %v429 = vpop.f32.mrf.mxu0
        %v430 = vadd.f32 %v386, %v429
        %431 = vdwg.mxu0
        %432 = vmatpush.msra.mxu0 0.0
        %433 = vmatpush.msra.mxu0 0.0
        %434 = vmatpush.msra.mxu0 0.0
        %435 = vmatpush.msra.mxu0 0.0
        %436 = vmatpush.msra.mxu0 0.0
        %437 = vmatpush.msra.mxu0 0.0
        %438 = vmatpush.msra.mxu0 0.0
        %439 = vmatpush.msra.mxu0 0.0
        %440 = vmatpush.msra.mxu0 0.0
        %441 = vmatpush.msra.mxu0 0.0
        %442 = vmatpush.msra.mxu0 0.0
        %443 = vmatpush.msra.mxu0 0.0
        %444 = vmatpush.msra.mxu0 0.0
        %v445 = vand.u32 %v243, 4294901760
        %v446 = vsub.f32 %v243, %v445
        %v447 = vand.u32 %v446, 4294901760
        %448 = vmatpush.msra.mxu0 %v447
        %v449 = vand.u32 %v222, 4294901760
        %v450 = vsub.f32 %v222, %v449
        %v451 = vand.u32 %v450, 4294901760
        %452 = vmatpush.msra.mxu0 %v451
        %v453 = vand.u32 %v221, 4294901760
        %v454 = vsub.f32 %v221, %v453
        %v455 = vand.u32 %v454, 4294901760
        %456 = vmatpush.msra.mxu0 %v455
        %v457 = vand.u32 %v230, 4294901760
        %458 = vmatmul.f32.gmra.mxu0 %v457
        %v459 = vpop.f32.mrf.mxu0
        %v460 = vadd.f32 %v412, %v459
        %v461 = vand.u32 %v233, 4294901760
        %462 = vmatmul.f32.gmra.mxu0 %v461
        %v463 = vpop.f32.mrf.mxu0
        %v464 = vadd.f32 %v418, %v463
        %v465 = vand.u32 %v236, 4294901760
        %466 = vmatmul.f32.gmra.mxu0 %v465
        %v467 = vpop.f32.mrf.mxu0
        %v468 = vadd.f32 %v424, %v467
        %v469 = vand.u32 %v239, 4294901760
        %470 = vmatmul.f32.gmra.mxu0 %v469
        %v471 = vpop.f32.mrf.mxu0
        %v472 = vadd.f32 %v430, %v471
        %473 = vdwg.mxu0
        %474 = vmatpush.msra.mxu0 0.0
        %475 = vmatpush.msra.mxu0 0.0
        %476 = vmatpush.msra.mxu0 0.0
        %477 = vmatpush.msra.mxu0 0.0
        %478 = vmatpush.msra.mxu0 0.0
        %479 = vmatpush.msra.mxu0 0.0
        %480 = vmatpush.msra.mxu0 0.0
        %481 = vmatpush.msra.mxu0 0.0
        %482 = vmatpush.msra.mxu0 0.0
        %483 = vmatpush.msra.mxu0 0.0
        %484 = vmatpush.msra.mxu0 0.0
        %485 = vmatpush.msra.mxu0 0.0
        %486 = vmatpush.msra.mxu0 0.0
        %v487 = vand.u32 %v243, 4294901760
        %488 = vmatpush.msra.mxu0 %v487
        %v489 = vand.u32 %v222, 4294901760
        %490 = vmatpush.msra.mxu0 %v489
        %v491 = vand.u32 %v221, 4294901760
        %492 = vmatpush.msra.mxu0 %v491
        %v493 = vand.u32 %v230, 4294901760
        %494 = vmatmul.f32.gmra.mxu0 %v493
        %v495 = vpop.f32.mrf.mxu0
        %v496 = vadd.f32 %v460, %v495
        %v497 = vand.u32 %v233, 4294901760
        %498 = vmatmul.f32.gmra.mxu0 %v497
        %v499 = vpop.f32.mrf.mxu0
        %v500 = vadd.f32 %v464, %v499
        %v501 = vand.u32 %v236, 4294901760
        %502 = vmatmul.f32.gmra.mxu0 %v501
        %v503 = vpop.f32.mrf.mxu0
        %v504 = vadd.f32 %v468, %v503
        %v505 = vand.u32 %v239, 4294901760
        %506 = vmatmul.f32.gmra.mxu0 %v505
        %v507 = vpop.f32.mrf.mxu0
        %v508 = vadd.f32 %v472, %v507
        %509 = vdwg.mxu0
        %v510 = vld [vmem:[%s2] sm:$0xff]
        %v511 = vld [vmem:[%s2 + $0x8] sm:$0xff]
        %v512 = vld [vmem:[%s2 + $0x10] sm:$0xf]
        %v514 = vsel %vm228, %v496, 0
        %v517 = vsel %vm228, %v500, 0
        %v520 = vsel %vm228, %v504, 0
        %v523 = vsel %vm228, %v508, 0
        %v526 = vsel %vm241, %v512, 0
        %528 = vmatpush.msra.mxu0 0.0
        %529 = vmatpush.msra.mxu0 0.0
        %530 = vmatpush.msra.mxu0 0.0
        %531 = vmatpush.msra.mxu0 0.0
        %532 = vmatpush.msra.mxu0 0.0
        %533 = vmatpush.msra.mxu0 0.0
        %534 = vmatpush.msra.mxu0 0.0
        %535 = vmatpush.msra.mxu0 0.0
        %536 = vmatpush.msra.mxu0 0.0
        %537 = vmatpush.msra.mxu0 0.0
        %538 = vmatpush.msra.mxu0 0.0
        %539 = vmatpush.msra.mxu0 0.0
        %540 = vmatpush.msra.mxu0 0.0
        %v541 = vand.u32 %v526, 4294901760
        %542 = vmatpush.msra.mxu0 %v541
        %v543 = vand.u32 %v511, 4294901760
        %544 = vmatpush.msra.mxu0 %v543
        %v545 = vand.u32 %v510, 4294901760
        %546 = vmatpush.msra.mxu0 %v545
        %v547 = vand.u32 %v514, 4294901760
        %v548 = vsub.f32 %v514, %v547
        %v549 = vand.u32 %v548, 4294901760
        %v550 = vsub.f32 %v548, %v549
        %v551 = vand.u32 %v550, 4294901760
        %552 = vmatmul.f32.gmra.mxu0 %v551
        %v553 = vpop.f32.mrf.mxu0
        %v554 = vadd.f32 0.0, %v553
        %v555 = vand.u32 %v517, 4294901760
        %v556 = vsub.f32 %v517, %v555
        %v557 = vand.u32 %v556, 4294901760
        %v558 = vsub.f32 %v556, %v557
        %v559 = vand.u32 %v558, 4294901760
        %560 = vmatmul.f32.gmra.mxu0 %v559
        %v561 = vpop.f32.mrf.mxu0
        %v562 = vadd.f32 0.0, %v561
        %v563 = vand.u32 %v520, 4294901760
        %v564 = vsub.f32 %v520, %v563
        %v565 = vand.u32 %v564, 4294901760
        %v566 = vsub.f32 %v564, %v565
        %v567 = vand.u32 %v566, 4294901760
        %568 = vmatmul.f32.gmra.mxu0 %v567
        %v569 = vpop.f32.mrf.mxu0
        %v570 = vadd.f32 0.0, %v569
        %v571 = vand.u32 %v523, 4294901760
        %v572 = vsub.f32 %v523, %v571
        %v573 = vand.u32 %v572, 4294901760
        %v574 = vsub.f32 %v572, %v573
        %v575 = vand.u32 %v574, 4294901760
        %576 = vmatmul.f32.gmra.mxu0 %v575
        %v577 = vpop.f32.mrf.mxu0
        %v578 = vadd.f32 0.0, %v577
        %579 = vdwg.mxu0
        %580 = vmatpush.msra.mxu0 0.0
        %581 = vmatpush.msra.mxu0 0.0
        %582 = vmatpush.msra.mxu0 0.0
        %583 = vmatpush.msra.mxu0 0.0
        %584 = vmatpush.msra.mxu0 0.0
        %585 = vmatpush.msra.mxu0 0.0
        %586 = vmatpush.msra.mxu0 0.0
        %587 = vmatpush.msra.mxu0 0.0
        %588 = vmatpush.msra.mxu0 0.0
        %589 = vmatpush.msra.mxu0 0.0
        %590 = vmatpush.msra.mxu0 0.0
        %591 = vmatpush.msra.mxu0 0.0
        %592 = vmatpush.msra.mxu0 0.0
        %v593 = vand.u32 %v526, 4294901760
        %v594 = vsub.f32 %v526, %v593
        %v595 = vand.u32 %v594, 4294901760
        %v596 = vsub.f32 %v594, %v595
        %v597 = vand.u32 %v596, 4294901760
        %598 = vmatpush.msra.mxu0 %v597
        %v599 = vand.u32 %v511, 4294901760
        %v600 = vsub.f32 %v511, %v599
        %v601 = vand.u32 %v600, 4294901760
        %v602 = vsub.f32 %v600, %v601
        %v603 = vand.u32 %v602, 4294901760
        %604 = vmatpush.msra.mxu0 %v603
        %v605 = vand.u32 %v510, 4294901760
        %v606 = vsub.f32 %v510, %v605
        %v607 = vand.u32 %v606, 4294901760
        %v608 = vsub.f32 %v606, %v607
        %v609 = vand.u32 %v608, 4294901760
        %610 = vmatpush.msra.mxu0 %v609
        %v611 = vand.u32 %v514, 4294901760
        %612 = vmatmul.f32.gmra.mxu0 %v611
        %v613 = vpop.f32.mrf.mxu0
        %v614 = vadd.f32 %v554, %v613
        %v615 = vand.u32 %v517, 4294901760
        %616 = vmatmul.f32.gmra.mxu0 %v615
        %v617 = vpop.f32.mrf.mxu0
        %v618 = vadd.f32 %v562, %v617
        %v619 = vand.u32 %v520, 4294901760
        %620 = vmatmul.f32.gmra.mxu0 %v619
        %v621 = vpop.f32.mrf.mxu0
        %v622 = vadd.f32 %v570, %v621
        %v623 = vand.u32 %v523, 4294901760
        %624 = vmatmul.f32.gmra.mxu0 %v623
        %v625 = vpop.f32.mrf.mxu0
        %v626 = vadd.f32 %v578, %v625
        %627 = vdwg.mxu0
        %628 = vmatpush.msra.mxu0 0.0
        %629 = vmatpush.msra.mxu0 0.0
        %630 = vmatpush.msra.mxu0 0.0
        %631 = vmatpush.msra.mxu0 0.0
        %632 = vmatpush.msra.mxu0 0.0
        %633 = vmatpush.msra.mxu0 0.0
        %634 = vmatpush.msra.mxu0 0.0
        %635 = vmatpush.msra.mxu0 0.0
        %636 = vmatpush.msra.mxu0 0.0
        %637 = vmatpush.msra.mxu0 0.0
        %638 = vmatpush.msra.mxu0 0.0
        %639 = vmatpush.msra.mxu0 0.0
        %640 = vmatpush.msra.mxu0 0.0
        %v641 = vand.u32 %v526, 4294901760
        %v642 = vsub.f32 %v526, %v641
        %643 = vmatpush.msra.mxu0 %v642
        %v644 = vand.u32 %v511, 4294901760
        %v645 = vsub.f32 %v511, %v644
        %646 = vmatpush.msra.mxu0 %v645
        %v647 = vand.u32 %v510, 4294901760
        %v648 = vsub.f32 %v510, %v647
        %649 = vmatpush.msra.mxu0 %v648
        %v650 = vand.u32 %v514, 4294901760
        %v651 = vsub.f32 %v514, %v650
        %652 = vmatmul.f32.gmra.mxu0 %v651
        %v653 = vpop.f32.mrf.mxu0
        %v654 = vadd.f32 %v614, %v653
        %v655 = vand.u32 %v517, 4294901760
        %v656 = vsub.f32 %v517, %v655
        %657 = vmatmul.f32.gmra.mxu0 %v656
        %v658 = vpop.f32.mrf.mxu0
        %v659 = vadd.f32 %v618, %v658
        %v660 = vand.u32 %v520, 4294901760
        %v661 = vsub.f32 %v520, %v660
        %662 = vmatmul.f32.gmra.mxu0 %v661
        %v663 = vpop.f32.mrf.mxu0
        %v664 = vadd.f32 %v622, %v663
        %v665 = vand.u32 %v523, 4294901760
        %v666 = vsub.f32 %v523, %v665
        %667 = vmatmul.f32.gmra.mxu0 %v666
        %v668 = vpop.f32.mrf.mxu0
        %v669 = vadd.f32 %v626, %v668
        %670 = vdwg.mxu0
        %671 = vmatpush.msra.mxu0 0.0
        %672 = vmatpush.msra.mxu0 0.0
        %673 = vmatpush.msra.mxu0 0.0
        %674 = vmatpush.msra.mxu0 0.0
        %675 = vmatpush.msra.mxu0 0.0
        %676 = vmatpush.msra.mxu0 0.0
        %677 = vmatpush.msra.mxu0 0.0
        %678 = vmatpush.msra.mxu0 0.0
        %679 = vmatpush.msra.mxu0 0.0
        %680 = vmatpush.msra.mxu0 0.0
        %681 = vmatpush.msra.mxu0 0.0
        %682 = vmatpush.msra.mxu0 0.0
        %683 = vmatpush.msra.mxu0 0.0
        %v684 = vand.u32 %v526, 4294901760
        %685 = vmatpush.msra.mxu0 %v684
        %v686 = vand.u32 %v511, 4294901760
        %687 = vmatpush.msra.mxu0 %v686
        %v688 = vand.u32 %v510, 4294901760
        %689 = vmatpush.msra.mxu0 %v688
        %v690 = vand.u32 %v514, 4294901760
        %v691 = vsub.f32 %v514, %v690
        %v692 = vand.u32 %v691, 4294901760
        %693 = vmatmul.f32.gmra.mxu0 %v692
        %v694 = vpop.f32.mrf.mxu0
        %v695 = vadd.f32 %v654, %v694
        %v696 = vand.u32 %v517, 4294901760
        %v697 = vsub.f32 %v517, %v696
        %v698 = vand.u32 %v697, 4294901760
        %699 = vmatmul.f32.gmra.mxu0 %v698
        %v700 = vpop.f32.mrf.mxu0
        %v701 = vadd.f32 %v659, %v700
        %v702 = vand.u32 %v520, 4294901760
        %v703 = vsub.f32 %v520, %v702
        %v704 = vand.u32 %v703, 4294901760
        %705 = vmatmul.f32.gmra.mxu0 %v704
        %v706 = vpop.f32.mrf.mxu0
        %v707 = vadd.f32 %v664, %v706
        %v708 = vand.u32 %v523, 4294901760
        %v709 = vsub.f32 %v523, %v708
        %v710 = vand.u32 %v709, 4294901760
        %711 = vmatmul.f32.gmra.mxu0 %v710
        %v712 = vpop.f32.mrf.mxu0
        %v713 = vadd.f32 %v669, %v712
        %714 = vdwg.mxu0
        %715 = vmatpush.msra.mxu0 0.0
        %716 = vmatpush.msra.mxu0 0.0
        %717 = vmatpush.msra.mxu0 0.0
        %718 = vmatpush.msra.mxu0 0.0
        %719 = vmatpush.msra.mxu0 0.0
        %720 = vmatpush.msra.mxu0 0.0
        %721 = vmatpush.msra.mxu0 0.0
        %722 = vmatpush.msra.mxu0 0.0
        %723 = vmatpush.msra.mxu0 0.0
        %724 = vmatpush.msra.mxu0 0.0
        %725 = vmatpush.msra.mxu0 0.0
        %726 = vmatpush.msra.mxu0 0.0
        %727 = vmatpush.msra.mxu0 0.0
        %v728 = vand.u32 %v526, 4294901760
        %v729 = vsub.f32 %v526, %v728
        %v730 = vand.u32 %v729, 4294901760
        %731 = vmatpush.msra.mxu0 %v730
        %v732 = vand.u32 %v511, 4294901760
        %v733 = vsub.f32 %v511, %v732
        %v734 = vand.u32 %v733, 4294901760
        %735 = vmatpush.msra.mxu0 %v734
        %v736 = vand.u32 %v510, 4294901760
        %v737 = vsub.f32 %v510, %v736
        %v738 = vand.u32 %v737, 4294901760
        %739 = vmatpush.msra.mxu0 %v738
        %v740 = vand.u32 %v514, 4294901760
        %741 = vmatmul.f32.gmra.mxu0 %v740
        %v742 = vpop.f32.mrf.mxu0
        %v743 = vadd.f32 %v695, %v742
        %v744 = vand.u32 %v517, 4294901760
        %745 = vmatmul.f32.gmra.mxu0 %v744
        %v746 = vpop.f32.mrf.mxu0
        %v747 = vadd.f32 %v701, %v746
        %v748 = vand.u32 %v520, 4294901760
        %749 = vmatmul.f32.gmra.mxu0 %v748
        %v750 = vpop.f32.mrf.mxu0
        %v751 = vadd.f32 %v707, %v750
        %v752 = vand.u32 %v523, 4294901760
        %753 = vmatmul.f32.gmra.mxu0 %v752
        %v754 = vpop.f32.mrf.mxu0
        %v755 = vadd.f32 %v713, %v754
        %756 = vdwg.mxu0
        %757 = vmatpush.msra.mxu0 0.0
        %758 = vmatpush.msra.mxu0 0.0
        %759 = vmatpush.msra.mxu0 0.0
        %760 = vmatpush.msra.mxu0 0.0
        %761 = vmatpush.msra.mxu0 0.0
        %762 = vmatpush.msra.mxu0 0.0
        %763 = vmatpush.msra.mxu0 0.0
        %764 = vmatpush.msra.mxu0 0.0
        %765 = vmatpush.msra.mxu0 0.0
        %766 = vmatpush.msra.mxu0 0.0
        %767 = vmatpush.msra.mxu0 0.0
        %768 = vmatpush.msra.mxu0 0.0
        %769 = vmatpush.msra.mxu0 0.0
        %v770 = vand.u32 %v526, 4294901760
        %771 = vmatpush.msra.mxu0 %v770
        %v772 = vand.u32 %v511, 4294901760
        %773 = vmatpush.msra.mxu0 %v772
        %v774 = vand.u32 %v510, 4294901760
        %775 = vmatpush.msra.mxu0 %v774
        %v776 = vand.u32 %v514, 4294901760
        %777 = vmatmul.f32.gmra.mxu0 %v776
        %v778 = vpop.f32.mrf.mxu0
        %v779 = vadd.f32 %v743, %v778
        %v780 = vand.u32 %v517, 4294901760
        %781 = vmatmul.f32.gmra.mxu0 %v780
        %v782 = vpop.f32.mrf.mxu0
        %v783 = vadd.f32 %v747, %v782
        %v784 = vand.u32 %v520, 4294901760
        %785 = vmatmul.f32.gmra.mxu0 %v784
        %v786 = vpop.f32.mrf.mxu0
        %v787 = vadd.f32 %v751, %v786
        %v788 = vand.u32 %v523, 4294901760
        %789 = vmatmul.f32.gmra.mxu0 %v788
        %v790 = vpop.f32.mrf.mxu0
        %v791 = vadd.f32 %v755, %v790
        %792 = vdwg.mxu0
        %vm793 = vcmask 261120
        %794 = vst.msk [vmem:[%s206] sm:$0xff] %vm793, %v779
        %795 = vst.msk [vmem:[%s206 + $0x8] sm:$0xff] %vm793, %v783
        %796 = vst.msk [vmem:[%s206 + $0x10] sm:$0xff] %vm793, %v787
        %797 = vst.msk [vmem:[%s206 + $0x18] sm:$0xff] %vm793, %v791
        %s798 = sand.u32 %s120, 1
        %s799 = scalar_lea.sflag [#allocation3], %s798
        %s800 = sand.u32 %s120, 1
        %s801 = smul.addr %s800, 32
        %s802 = scalar_lea.vmem [#allocation2], %s801
        // Predicated region
        $region33: #{tpu_custom_call.1} parent=31 // pred_check
          %p803 = pneg %p130
        $region34: #{tpu_custom_call.1} parent=31 // pred_check_branch
          %805 = sbr.rel (%p803) target = $region36
        $region35: #{tpu_custom_call.1} parent=31 // pred_region
          %s806 = smul.u32 4, %s23
          %808 = vsyncadd %s799, 0
          %s809 = sadd.s32 %s24, %s806
          %s810 = smul.addr %s22, 4
          %s811 = sadd.s32 %s809, %s810
          %s812 = smul.addr %s811, 8
          %s813 = scalar_lea.hbm %s3, %s812
          %s814 = sshll.u32 %s802, 4
          %s815 = int_to_ptr.vmem [resolvable:$true] %s814
          %s816 = sshll.u32 %s813, 4
          %s817 = int_to_ptr.hbm [resolvable:$true] %s816
          %822 = dma.vmem_to_hbm [thread:$0]  %s815, 512, %s817, %s799, 128, 128, 8
        $region36: #{tpu_custom_call.1} parent=31 // pred_fallthru
          _
      $region32: #{tpu_custom_call.1} parent=5 // pred_fallthru
        _
      %p823 = scmp.le.s32.totalorder 2, %s12
      // Predicated region
      $region37: #{tpu_custom_call.1} parent=5 // pred_check
        %p824 = pneg %p823
      $region38: #{tpu_custom_call.1} parent=5 // pred_check_branch
        %826 = sbr.rel (%p824) target = $region40
      $region39: #{tpu_custom_call.1} parent=5 // pred_region
        %s827 = ssub.s32 %s12, 2
        // Predicated region
        $region41: #{tpu_custom_call.1} parent=39 // pred_check
          %p828 = pneg %p136
        $region42: #{tpu_custom_call.1} parent=39 // pred_check_branch
          %830 = sbr.rel (%p828) target = $region44
        $region43: #{tpu_custom_call.1} parent=39 // pred_region
          %s831 = sand.u32 %s121, 1
          %s832 = scalar_lea.sflag [#allocation3], %s831
          %s833 = sand.u32 %s121, 1
          %s834 = smul.addr %s833, 32
          %s835 = scalar_lea.vmem [#allocation2], %s834
          %837 = dma.done %s832, 512
        $region44: #{tpu_custom_call.1} parent=39 // pred_fallthru
          _
      $region40: #{tpu_custom_call.1} parent=5 // pred_fallthru
        _
    $region6: #{tpu_custom_call.1} parent=1 // loop_footer
      %s16 = sadd.s32 1, %s12
    $region7: #{tpu_custom_call.1} parent=1 // loop_footer_branch
      %11 = sbr.rel target = $region3
    $region8: #{tpu_custom_call.1} parent=1 // loop_exit
      _
    %838 = vsyncpa [#allocation3], 1
    %s839 = scalar_lea.sflag [#allocation3], 1
    %840 = vsyncpa %s839, 1

</llo_original>
